<compile_context>
chip_gen: v7x
topology: tpu7x:2x2x1
jax: 0.10.0
libtpu: 0.0.40
codegen_flags: <defaults>
</compile_context>

<pallas_src>
import numpy as np
import jax
import jax.numpy as jnp
from jax.experimental import pallas as pl
from jax.experimental.pallas import tpu as pltpu

LOG_STD_MIN = -20.0
LOG_STD_MAX = 2.0
LEAKY_SLOPE = 0.01  # torch.nn.LeakyReLU default negative_slope
_LOG2 = float(np.log(2.0))
_LOG_2PI = float(np.log(2.0 * np.pi))


def _round_up(x, m):
    return ((x + m - 1) // m) * m


def _leaky_relu(x):
    return jnp.where(x > 0, x, LEAKY_SLOPE * x)


def _softplus(x):
    # numerically stable softplus (keep this form: log1p(-tanh^2) would -inf)
    return jnp.maximum(x, 0.0) + jnp.log1p(jnp.exp(-jnp.abs(x)))


def _make_actor_kernel(a_pad: int, action_dim: int):
    """Build the fused actor kernel for lane-padded action width `a_pad`."""
    log_prob_const = -0.5 * action_dim * _LOG_2PI  # true action_dim, not padded

    def kernel(obs_ref, w1_ref, b1_ref, w2_ref, b2_ref,
               whead_ref, bhead_ref, eps_ref, head_ref, lprob_ref):
        # bf16 MXU inputs, f32 accumulation / elementwise path.
        obs = obs_ref[...].astype(jnp.bfloat16)

        # phi = LeakyReLU(Linear(LeakyReLU(Linear(obs))))
        h1 = _leaky_relu(
            jnp.dot(obs, w1_ref[...], preferred_element_type=jnp.float32)
            + b1_ref[...])
        h2 = _leaky_relu(
            jnp.dot(h1.astype(jnp.bfloat16), w2_ref[...],
                    preferred_element_type=jnp.float32)
            + b2_ref[...])

        # row L2 normalisation (rsqrt -> EUP slot; padded hid lanes are zero
        # so they do not perturb the norm; +1e-12 guards all-zero padded rows).
        inv = jax.lax.rsqrt(jnp.sum(h2 * h2, axis=1, keepdims=True) + 1e-12)
        phi = (h2 * inv).astype(jnp.bfloat16)

        # fused mu / log_std heads: one matmul, lane-aligned split
        head = (jnp.dot(phi, whead_ref[...],
                        preferred_element_type=jnp.float32)
                + bhead_ref[...])
        mu = head[:, :a_pad]
        log_std = jnp.clip(head[:, a_pad:], LOG_STD_MIN, LOG_STD_MAX)

        # MultivariateNormal(mu, diag(exp(log_std)))  =>  std = exp(0.5*log_std)
        std = jnp.exp(0.5 * log_std)
        eps = eps_ref[...]
        action_pre = mu + std * eps

        # log N(action_pre | mu, diag(exp(log_std)))
        #   = -0.5*sum(eps^2) - 0.5*sum(log_std) - 0.5*d*log(2*pi)
        # (padded lanes of eps and log_std are exactly zero)
        lprob = (-0.5 * jnp.sum(eps * eps, axis=1, keepdims=True)
                 - 0.5 * jnp.sum(log_std, axis=1, keepdims=True)
                 + log_prob_const)

        # tanh change-of-variables correction; mask padded action lanes.
        lane = jax.lax.broadcasted_iota(jnp.int32, (1, a_pad), 1)
        valid = (lane < action_dim).astype(jnp.float32)
        corr = 2.0 * (_LOG2 - action_pre - _softplus(-2.0 * action_pre))
        lprob = lprob - jnp.sum(corr * valid, axis=1, keepdims=True)

        # Direct lane-aligned sliced stores (offsets are multiples of 128):
        # no concatenate temporary, unmasked lane-dense vst.
        head_ref[:, 0:a_pad] = mu
        head_ref[:, a_pad:2 * a_pad] = log_std
        head_ref[:, 2 * a_pad:3 * a_pad] = action_pre
        lprob_ref[...] = lprob

    return kernel


def actor_forward(obs, params, eps, *, batch_tile=512):
    """Run the fused Actor forward kernel.

    obs: (B, obs_dim) f32, eps: (B, action_dim) f32 standard-normal noise.
    Returns (action, {'mu', 'log_std', 'lprob', 'action_pre'}).
    """
    B, obs_dim = obs.shape
    n_hid = params["w1"].shape[1]
    action_dim = params["wmu"].shape[1]

    # lane-pad hidden / action dims to multiples of 128 (zero padding is inert);
    # obs keeps its true feature width (full-array-dim block).
    hid_p = _round_up(n_hid, 128)
    a_pad = _round_up(action_dim, 128)

    # batch tiling: multiple of 8, and prefer >= 2 grid steps so v7x's two
    # TensorCores both get work under dimension_semantics=("parallel",).
    tb = max(8, _round_up(min(batch_tile, B), 8))
    b_pad = _round_up(B, tb)
    if b_pad // tb < 2 and B > 8:
        tb = max(8, _round_up(-(-B // 2), 8))
        b_pad = _round_up(B, tb)
    grid = (b_pad // tb,)

    def padf32(x, r, c):
        x = x.astype(jnp.float32)
        return jnp.pad(x, ((0, r - x.shape[0]), (0, c - x.shape[1])))

    obs_pd = padf32(obs, b_pad, obs_dim)           # batch pad only
    eps_pd = padf32(eps, b_pad, a_pad)
    # weights in bf16 (MXU-native); biases stay f32 (added to f32 accumulators).
    w1 = padf32(params["w1"], obs_dim, hid_p).astype(jnp.bfloat16)
    b1 = padf32(params["b1"], 1, hid_p)
    w2 = padf32(params["w2"], hid_p, hid_p).astype(jnp.bfloat16)
    b2 = padf32(params["b2"], 1, hid_p)
    whead = jnp.concatenate([padf32(params["wmu"], hid_p, a_pad),
                             padf32(params["wls"], hid_p, a_pad)],
                            axis=1).astype(jnp.bfloat16)
    bhead = jnp.concatenate([padf32(params["bmu"], 1, a_pad),
                             padf32(params["bls"], 1, a_pad)], axis=1)

    out_w = 3 * a_pad

    # NOTE(v7x): constant-index weight specs could use pipeline_mode=
    # pl.Buffered(1) to halve resident-weight VMEM for large n_hid; at these
    # sizes the double-buffered copies are tiny so it is left at the default.
    grid_spec = pl.GridSpec(
        grid=grid,
        in_specs=[
            pl.BlockSpec((tb, obs_dim), lambda i: (i, 0)),        # obs  (tiled)
            pl.BlockSpec((obs_dim, hid_p), lambda i: (0, 0)),     # w1   (resident)
            pl.BlockSpec((1, hid_p), lambda i: (0, 0)),           # b1
            pl.BlockSpec((hid_p, hid_p), lambda i: (0, 0)),       # w2
            pl.BlockSpec((1, hid_p), lambda i: (0, 0)),           # b2
            pl.BlockSpec((hid_p, 2 * a_pad), lambda i: (0, 0)),   # whead
            pl.BlockSpec((1, 2 * a_pad), lambda i: (0, 0)),       # bhead
            pl.BlockSpec((tb, a_pad), lambda i: (i, 0)),          # eps  (tiled)
        ],
        out_specs=(
            pl.BlockSpec((tb, out_w), lambda i: (i, 0)),          # [mu|ls|pre]
            pl.BlockSpec((tb, 1), lambda i: (i, 0)),              # lprob
        ),
    )

    flops = int(2 * b_pad * (obs_dim * hid_p + hid_p * hid_p
                             + hid_p * 2 * a_pad))
    transcendentals = int(b_pad * (3 * a_pad + 1))
    bytes_accessed = int(4 * (obs_pd.size + eps_pd.size + b1.size + b2.size
                              + bhead.size + b_pad * (out_w + 1))
                         + 2 * (w1.size + w2.size + whead.size))

    head, lprob_col = pl.pallas_call(
        _make_actor_kernel(a_pad, action_dim),
        out_shape=(jax.ShapeDtypeStruct((b_pad, out_w), jnp.float32),
                   jax.ShapeDtypeStruct((b_pad, 1), jnp.float32)),
        grid_spec=grid_spec,
        compiler_params=pltpu.CompilerParams(
            dimension_semantics=("parallel",)),
        cost_estimate=pl.CostEstimate(flops=flops,
                                      transcendentals=transcendentals,
                                      bytes_accessed=bytes_accessed),
    )(obs_pd, w1, b1, w2, b2, whead, bhead, eps_pd)

    mu = head[:B, 0:action_dim]
    log_std = head[:B, a_pad:a_pad + action_dim]
    action_pre = head[:B, 2 * a_pad:2 * a_pad + action_dim]
    lprob = lprob_col[:B, 0]
    action = jnp.tanh(action_pre)  # recomputed in wrapper (cheap), saves a slab

    info = {"mu": mu, "log_std": log_std, "lprob": lprob,
            "action_pre": action_pre}
    return action, info


# ----------------------------------------------------------------------------
# pure-JAX reference (mirrors the PyTorch forward) + param construction
# ----------------------------------------------------------------------------
def actor_forward_ref(obs, params, eps):
    h1 = _leaky_relu(obs @ params["w1"] + params["b1"])
    h2 = _leaky_relu(h1 @ params["w2"] + params["b2"])
    phi = h2 / jnp.linalg.norm(h2, axis=1, keepdims=True)
    mu = phi @ params["wmu"] + params["bmu"]
    log_std = jnp.clip(phi @ params["wls"] + params["bls"],
                       LOG_STD_MIN, LOG_STD_MAX)
    std = jnp.exp(0.5 * log_std)
    action_pre = mu + std * eps
    d = mu.shape[-1]
    lprob = (-0.5 * jnp.sum(eps * eps, axis=1)
             - 0.5 * jnp.sum(log_std, axis=1)
             - 0.5 * d * _LOG_2PI)
    lprob = lprob - jnp.sum(
        2.0 * (_LOG2 - action_pre - jax.nn.softplus(-2.0 * action_pre)), axis=1)
    return jnp.tanh(action_pre), mu, log_std, lprob, action_pre


def orthogonal_init(key, in_dim, out_dim):
    """Deterministic orthogonal init, returned as (in_dim, out_dim)."""
    a = jax.random.normal(key, (max(in_dim, out_dim), min(in_dim, out_dim)),
                          dtype=jnp.float32)
    q, r = jnp.linalg.qr(a)
    q = q * jnp.sign(jnp.diagonal(r))[None, :]
    if in_dim < out_dim:
        q = q.T
    return q.astype(jnp.float32)


def make_params(key, obs_dim, n_hid, action_dim):
    k1, k2, k3, k4 = jax.random.split(key, 4)
    return {
        "w1": orthogonal_init(k1, obs_dim, n_hid),
        "b1": jnp.zeros((1, n_hid), jnp.float32),
        "w2": orthogonal_init(k2, n_hid, n_hid),
        "b2": jnp.zeros((1, n_hid), jnp.float32),
        "wmu": orthogonal_init(k3, n_hid, action_dim),
        "bmu": jnp.zeros((1, action_dim), jnp.float32),
        "wls": orthogonal_init(k4, n_hid, action_dim),
        "bls": jnp.zeros((1, action_dim), jnp.float32),
    }


if __name__ == "__main__":
    B, obs_dim, n_hid, action_dim = 64, 16, 32, 4

    root = jax.random.PRNGKey(0)
    k_params, k_obs, k_eps = jax.random.split(root, 3)

    params = make_params(k_params, obs_dim, n_hid, action_dim)
    obs = jax.random.normal(k_obs, (B, obs_dim), dtype=jnp.float32)
    eps = jax.random.normal(k_eps, (B, action_dim), dtype=jnp.float32)

    # default batch_tile=512 -> auto-shrunk to 2 grid steps at this batch size
    action, info = actor_forward(obs, params, eps)
    jax.block_until_ready((action, info))

    # shape / range sanity
    assert action.shape == (B, action_dim)
    assert info["mu"].shape == (B, action_dim)
    assert info["log_std"].shape == (B, action_dim)
    assert info["lprob"].shape == (B,)
    assert info["action_pre"].shape == (B, action_dim)
    assert bool(jnp.all(jnp.abs(action) <= 1.0))
    assert bool(jnp.all(jnp.isfinite(info["lprob"])))

    # numerical check against the pure-JAX reference of the torch module
    # (tolerance accounts for bf16 MXU inputs with f32 accumulation)
    ra, rmu, rls, rlp, rap = actor_forward_ref(obs, params, eps)
    np.testing.assert_allclose(np.asarray(action), np.asarray(ra),
                               rtol=2e-2, atol=3e-2)
    np.testing.assert_allclose(np.asarray(info["mu"]), np.asarray(rmu),
                               rtol=2e-2, atol=3e-2)
    np.testing.assert_allclose(np.asarray(info["log_std"]), np.asarray(rls),
                               rtol=2e-2, atol=3e-2)
    np.testing.assert_allclose(np.asarray(info["action_pre"]), np.asarray(rap),
                               rtol=2e-2, atol=3e-2)
    np.testing.assert_allclose(np.asarray(info["lprob"]), np.asarray(rlp),
                               rtol=2e-2, atol=5e-2)

    print("KERNEL_OK")
</pallas_src>

<mosaic_0001>
module attributes {stable_mosaic.version = 11 : i64} {
  func.func @kernel(%arg0: i32, %arg1: memref<32x16xf32, #tpu.memory_space<vmem>>, %arg2: memref<16x128xbf16, #tpu.memory_space<vmem>>, %arg3: memref<1x128xf32, #tpu.memory_space<vmem>>, %arg4: memref<128x128xbf16, #tpu.memory_space<vmem>>, %arg5: memref<1x128xf32, #tpu.memory_space<vmem>>, %arg6: memref<128x256xbf16, #tpu.memory_space<vmem>>, %arg7: memref<1x256xf32, #tpu.memory_space<vmem>>, %arg8: memref<32x128xf32, #tpu.memory_space<vmem>>, %arg9: memref<32x384xf32, #tpu.memory_space<vmem>>, %arg10: memref<32x1xf32, #tpu.memory_space<vmem>>) attributes {dimension_semantics = [#tpu.dimension_semantics<parallel>], iteration_bounds = array<i64: 2>, scalar_prefetch = 0 : i64, scratch_operands = 0 : i64, tpu.core_type = #tpu.core_type<tc>, window_params = [{transform_indices = @transform_0, window_bounds = array<i64: 32, 16>}, {pipeline_mode = #tpu.pipeline_mode<synchronous>, transform_indices = @transform_1, window_bounds = array<i64: 16, 128>}, {pipeline_mode = #tpu.pipeline_mode<synchronous>, transform_indices = @transform_2, window_bounds = array<i64: 1, 128>}, {pipeline_mode = #tpu.pipeline_mode<synchronous>, transform_indices = @transform_3, window_bounds = array<i64: 128, 128>}, {pipeline_mode = #tpu.pipeline_mode<synchronous>, transform_indices = @transform_4, window_bounds = array<i64: 1, 128>}, {pipeline_mode = #tpu.pipeline_mode<synchronous>, transform_indices = @transform_5, window_bounds = array<i64: 128, 256>}, {pipeline_mode = #tpu.pipeline_mode<synchronous>, transform_indices = @transform_6, window_bounds = array<i64: 1, 256>}, {transform_indices = @transform_7, window_bounds = array<i64: 32, 128>}, {transform_indices = @transform_8, window_bounds = array<i64: 32, 384>}, {transform_indices = @transform_9, window_bounds = array<i64: 32, 1>}]} {
    %c0 = arith.constant 0 : index
    %c0_0 = arith.constant 0 : index
    %0 = vector.load %arg1[%c0, %c0_0] : memref<32x16xf32, #tpu.memory_space<vmem>>, vector<32x16xf32>
    %1 = arith.truncf %0 : vector<32x16xf32> to vector<32x16xbf16>
    %c0_1 = arith.constant 0 : index
    %c0_2 = arith.constant 0 : index
    %2 = vector.load %arg2[%c0_1, %c0_2] : memref<16x128xbf16, #tpu.memory_space<vmem>>, vector<16x128xbf16>
    %cst = arith.constant dense<0.000000e+00> : vector<32x128xf32>
    %3 = tpu.matmul %1, %2, %cst {dimension_numbers = #tpu.dot_dimension_numbers<[1], [0], [0], [1], [0, 0, 1, 1], [], []>} : vector<32x16xbf16>, vector<16x128xbf16>, vector<32x128xf32> -> vector<32x128xf32>
    %c0_3 = arith.constant 0 : index
    %c0_4 = arith.constant 0 : index
    %4 = vector.load %arg3[%c0_3, %c0_4] : memref<1x128xf32, #tpu.memory_space<vmem>>, vector<1x128xf32>
    %5 = vector.broadcast %4 : vector<1x128xf32> to vector<32x128xf32>
    %6 = arith.addf %3, %5 : vector<32x128xf32>
    %cst_5 = arith.constant 0.000000e+00 : f32
    %7 = vector.broadcast %cst_5 : f32 to vector<32x128xf32>
    %8 = arith.cmpf ogt, %6, %7 : vector<32x128xf32>
    %cst_6 = arith.constant 0.00999999977 : f32
    %9 = vector.broadcast %cst_6 : f32 to vector<32x128xf32>
    %10 = arith.mulf %9, %6 : vector<32x128xf32>
    %11 = arith.select %8, %6, %10 : vector<32x128xi1>, vector<32x128xf32>
    %12 = arith.truncf %11 : vector<32x128xf32> to vector<32x128xbf16>
    %c0_7 = arith.constant 0 : index
    %c0_8 = arith.constant 0 : index
    %13 = vector.load %arg4[%c0_7, %c0_8] : memref<128x128xbf16, #tpu.memory_space<vmem>>, vector<128x128xbf16>
    %cst_9 = arith.constant dense<0.000000e+00> : vector<32x128xf32>
    %14 = tpu.matmul %12, %13, %cst_9 {dimension_numbers = #tpu.dot_dimension_numbers<[1], [0], [0], [1], [0, 0, 1, 1], [], []>} : vector<32x128xbf16>, vector<128x128xbf16>, vector<32x128xf32> -> vector<32x128xf32>
    %c0_10 = arith.constant 0 : index
    %c0_11 = arith.constant 0 : index
    %15 = vector.load %arg5[%c0_10, %c0_11] : memref<1x128xf32, #tpu.memory_space<vmem>>, vector<1x128xf32>
    %16 = vector.broadcast %15 : vector<1x128xf32> to vector<32x128xf32>
    %17 = arith.addf %14, %16 : vector<32x128xf32>
    %cst_12 = arith.constant 0.000000e+00 : f32
    %18 = vector.broadcast %cst_12 : f32 to vector<32x128xf32>
    %19 = arith.cmpf ogt, %17, %18 : vector<32x128xf32>
    %cst_13 = arith.constant 0.00999999977 : f32
    %20 = vector.broadcast %cst_13 : f32 to vector<32x128xf32>
    %21 = arith.mulf %20, %17 : vector<32x128xf32>
    %22 = arith.select %19, %17, %21 : vector<32x128xi1>, vector<32x128xf32>
    %23 = arith.mulf %22, %22 : vector<32x128xf32>
    %cst_14 = arith.constant dense<0.000000e+00> : vector<32xf32>
    %24 = vector.multi_reduction <add>, %23, %cst_14 [1] : vector<32x128xf32> to vector<32xf32>
    %25 = vector.shape_cast %24 : vector<32xf32> to vector<32x1xf32>
    %cst_15 = arith.constant 9.99999996E-13 : f32
    %26 = vector.broadcast %cst_15 : f32 to vector<32x1xf32>
    %27 = arith.addf %25, %26 : vector<32x1xf32>
    %28 = math.rsqrt %27 : vector<32x1xf32>
    %29 = vector.broadcast %28 : vector<32x1xf32> to vector<32x128xf32>
    %30 = arith.mulf %22, %29 : vector<32x128xf32>
    %31 = arith.truncf %30 : vector<32x128xf32> to vector<32x128xbf16>
    %c0_16 = arith.constant 0 : index
    %c0_17 = arith.constant 0 : index
    %32 = vector.load %arg6[%c0_16, %c0_17] : memref<128x256xbf16, #tpu.memory_space<vmem>>, vector<128x256xbf16>
    %cst_18 = arith.constant dense<0.000000e+00> : vector<32x256xf32>
    %33 = tpu.matmul %31, %32, %cst_18 {dimension_numbers = #tpu.dot_dimension_numbers<[1], [0], [0], [1], [0, 0, 1, 1], [], []>} : vector<32x128xbf16>, vector<128x256xbf16>, vector<32x256xf32> -> vector<32x256xf32>
    %c0_19 = arith.constant 0 : index
    %c0_20 = arith.constant 0 : index
    %34 = vector.load %arg7[%c0_19, %c0_20] : memref<1x256xf32, #tpu.memory_space<vmem>>, vector<1x256xf32>
    %35 = vector.broadcast %34 : vector<1x256xf32> to vector<32x256xf32>
    %36 = arith.addf %33, %35 : vector<32x256xf32>
    %37 = vector.extract_strided_slice %36 {offsets = [0, 0], sizes = [32, 128], strides = [1, 1]} : vector<32x256xf32> to vector<32x128xf32>
    %38 = vector.extract_strided_slice %36 {offsets = [0, 128], sizes = [32, 128], strides = [1, 1]} : vector<32x256xf32> to vector<32x128xf32>
    %cst_21 = arith.constant -2.000000e+01 : f32
    %cst_22 = arith.constant 2.000000e+00 : f32
    %39 = vector.broadcast %cst_21 : f32 to vector<32x128xf32>
    %40 = arith.maximumf %39, %38 : vector<32x128xf32>
    %41 = vector.broadcast %cst_22 : f32 to vector<32x128xf32>
    %42 = arith.minimumf %41, %40 : vector<32x128xf32>
    %cst_23 = arith.constant 5.000000e-01 : f32
    %43 = vector.broadcast %cst_23 : f32 to vector<32x128xf32>
    %44 = arith.mulf %43, %42 : vector<32x128xf32>
    %45 = math.exp %44 : vector<32x128xf32>
    %c0_24 = arith.constant 0 : index
    %c0_25 = arith.constant 0 : index
    %46 = vector.load %arg8[%c0_24, %c0_25] : memref<32x128xf32, #tpu.memory_space<vmem>>, vector<32x128xf32>
    %47 = arith.mulf %45, %46 : vector<32x128xf32>
    %48 = arith.addf %37, %47 : vector<32x128xf32>
    %49 = arith.mulf %46, %46 : vector<32x128xf32>
    %cst_26 = arith.constant dense<0.000000e+00> : vector<32xf32>
    %50 = vector.multi_reduction <add>, %49, %cst_26 [1] : vector<32x128xf32> to vector<32xf32>
    %51 = vector.shape_cast %50 : vector<32xf32> to vector<32x1xf32>
    %cst_27 = arith.constant -5.000000e-01 : f32
    %52 = vector.broadcast %cst_27 : f32 to vector<32x1xf32>
    %53 = arith.mulf %52, %51 : vector<32x1xf32>
    %cst_28 = arith.constant dense<0.000000e+00> : vector<32xf32>
    %54 = vector.multi_reduction <add>, %42, %cst_28 [1] : vector<32x128xf32> to vector<32xf32>
    %55 = vector.shape_cast %54 : vector<32xf32> to vector<32x1xf32>
    %cst_29 = arith.constant 5.000000e-01 : f32
    %56 = vector.broadcast %cst_29 : f32 to vector<32x1xf32>
    %57 = arith.mulf %56, %55 : vector<32x1xf32>
    %58 = arith.subf %53, %57 : vector<32x1xf32>
    %cst_30 = arith.constant -3.67575407 : f32
    %59 = vector.broadcast %cst_30 : f32 to vector<32x1xf32>
    %60 = arith.addf %58, %59 : vector<32x1xf32>
    %61 = tpu.iota {dimensions = array<i32: 1>} : vector<1x128xi32>
    %c4_i32 = arith.constant 4 : i32
    %62 = vector.broadcast %c4_i32 : i32 to vector<1x128xi32>
    %63 = arith.cmpi slt, %61, %62 : vector<1x128xi32>
    %64 = arith.extui %63 : vector<1x128xi1> to vector<1x128xi32>
    %65 = arith.sitofp %64 : vector<1x128xi32> to vector<1x128xf32>
    %cst_31 = arith.constant 0.693147182 : f32
    %66 = vector.broadcast %cst_31 : f32 to vector<32x128xf32>
    %67 = arith.subf %66, %48 : vector<32x128xf32>
    %cst_32 = arith.constant -2.000000e+00 : f32
    %68 = vector.broadcast %cst_32 : f32 to vector<32x128xf32>
    %69 = arith.mulf %68, %48 : vector<32x128xf32>
    %cst_33 = arith.constant 0.000000e+00 : f32
    %70 = vector.broadcast %cst_33 : f32 to vector<32x128xf32>
    %71 = arith.maximumf %69, %70 : vector<32x128xf32>
    %72 = math.absf %69 : vector<32x128xf32>
    %cst_34 = arith.constant 0.000000e+00 : f32
    %73 = vector.broadcast %cst_34 : f32 to vector<32x128xf32>
    %74 = arith.subf %73, %72 : vector<32x128xf32>
    %75 = math.exp %74 : vector<32x128xf32>
    %76 = math.log1p %75 : vector<32x128xf32>
    %77 = arith.addf %71, %76 : vector<32x128xf32>
    %78 = arith.subf %67, %77 : vector<32x128xf32>
    %cst_35 = arith.constant 2.000000e+00 : f32
    %79 = vector.broadcast %cst_35 : f32 to vector<32x128xf32>
    %80 = arith.mulf %79, %78 : vector<32x128xf32>
    %81 = vector.broadcast %65 : vector<1x128xf32> to vector<32x128xf32>
    %82 = arith.mulf %80, %81 : vector<32x128xf32>
    %cst_36 = arith.constant dense<0.000000e+00> : vector<32xf32>
    %83 = vector.multi_reduction <add>, %82, %cst_36 [1] : vector<32x128xf32> to vector<32xf32>
    %84 = vector.shape_cast %83 : vector<32xf32> to vector<32x1xf32>
    %85 = arith.subf %60, %84 : vector<32x1xf32>
    %c0_37 = arith.constant 0 : index
    %c0_38 = arith.constant 0 : index
    %86 = vector.load %arg9[%c0_37, %c0_38] : memref<32x384xf32, #tpu.memory_space<vmem>>, vector<32x128xf32>
    tpu.vector_store %arg9[%c0_37, %c0_38], %37 {strides = array<i32>} : memref<32x384xf32, #tpu.memory_space<vmem>>, vector<32x128xf32>,
    %c0_39 = arith.constant 0 : index
    %c128 = arith.constant 128 : index
    %87 = vector.load %arg9[%c0_39, %c128] : memref<32x384xf32, #tpu.memory_space<vmem>>, vector<32x128xf32>
    tpu.vector_store %arg9[%c0_39, %c128], %42 {strides = array<i32>} : memref<32x384xf32, #tpu.memory_space<vmem>>, vector<32x128xf32>,
    %c0_40 = arith.constant 0 : index
    %c256 = arith.constant 256 : index
    %88 = vector.load %arg9[%c0_40, %c256] : memref<32x384xf32, #tpu.memory_space<vmem>>, vector<32x128xf32>
    tpu.vector_store %arg9[%c0_40, %c256], %48 {strides = array<i32>} : memref<32x384xf32, #tpu.memory_space<vmem>>, vector<32x128xf32>,
    %c0_41 = arith.constant 0 : index
    %c0_42 = arith.constant 0 : index
    %89 = vector.load %arg10[%c0_41, %c0_42] : memref<32x1xf32, #tpu.memory_space<vmem>>, vector<32x1xf32>
    tpu.vector_store %arg10[%c0_41, %c0_42], %85 {strides = array<i32>} : memref<32x1xf32, #tpu.memory_space<vmem>>, vector<32x1xf32>,
    return
  }
  func.func @transform_0(%arg0: i32) -> (i32, i32) {
    %c0_i32 = arith.constant 0 : i32
    %c0_i32_0 = arith.constant 0 : i32
    return %arg0, %c0_i32 : i32, i32
  }
  func.func @transform_1(%arg0: i32) -> (i32, i32) {
    %c0_i32 = arith.constant 0 : i32
    %c0_i32_0 = arith.constant 0 : i32
    %c0_i32_1 = arith.constant 0 : i32
    return %c0_i32, %c0_i32_0 : i32, i32
  }
  func.func @transform_2(%arg0: i32) -> (i32, i32) {
    %c0_i32 = arith.constant 0 : i32
    %c0_i32_0 = arith.constant 0 : i32
    %c0_i32_1 = arith.constant 0 : i32
    return %c0_i32, %c0_i32_0 : i32, i32
  }
  func.func @transform_3(%arg0: i32) -> (i32, i32) {
    %c0_i32 = arith.constant 0 : i32
    %c0_i32_0 = arith.constant 0 : i32
    %c0_i32_1 = arith.constant 0 : i32
    return %c0_i32, %c0_i32_0 : i32, i32
  }
  func.func @transform_4(%arg0: i32) -> (i32, i32) {
    %c0_i32 = arith.constant 0 : i32
    %c0_i32_0 = arith.constant 0 : i32
    %c0_i32_1 = arith.constant 0 : i32
    return %c0_i32, %c0_i32_0 : i32, i32
  }
  func.func @transform_5(%arg0: i32) -> (i32, i32) {
    %c0_i32 = arith.constant 0 : i32
    %c0_i32_0 = arith.constant 0 : i32
    %c0_i32_1 = arith.constant 0 : i32
    return %c0_i32, %c0_i32_0 : i32, i32
  }
  func.func @transform_6(%arg0: i32) -> (i32, i32) {
    %c0_i32 = arith.constant 0 : i32
    %c0_i32_0 = arith.constant 0 : i32
    %c0_i32_1 = arith.constant 0 : i32
    return %c0_i32, %c0_i32_0 : i32, i32
  }
  func.func @transform_7(%arg0: i32) -> (i32, i32) {
    %c0_i32 = arith.constant 0 : i32
    %c0_i32_0 = arith.constant 0 : i32
    return %arg0, %c0_i32 : i32, i32
  }
  func.func @transform_8(%arg0: i32) -> (i32, i32) {
    %c0_i32 = arith.constant 0 : i32
    %c0_i32_0 = arith.constant 0 : i32
    return %arg0, %c0_i32 : i32, i32
  }
  func.func @transform_9(%arg0: i32) -> (i32, i32) {
    %c0_i32 = arith.constant 0 : i32
    %c0_i32_0 = arith.constant 0 : i32
    return %arg0, %c0_i32 : i32, i32
  }
}

</mosaic_0001>

<llo_original>
// kernel: tpu_custom_call.1
$region0: #{tpu_custom_call.1}
  #allocation0 [shape = 'u32[]', space=smem, size = 0x4, offset = 0x4, fixed_abs, tag = 'smem constant byte address 0x4 - core index']
  #allocation1 [shape = 'u32[144,128]{1,0:T(1,128)}', space=vmem, size = 0x12000, scoped, tag = 'internal scratch']
  %s0 = inlined_call_operand.vmem [shape: f32[64,16], index: 0, kind: input, shape index: {}]
  %s1 = inlined_call_operand.vmem [shape: bf16[16,128], index: 1, kind: input, shape index: {}]
  %s2 = inlined_call_operand.vmem [shape: f32[1,128], index: 2, kind: input, shape index: {}]
  %s3 = inlined_call_operand.vmem [shape: bf16[128,128], index: 3, kind: input, shape index: {}]
  %s4 = inlined_call_operand.vmem [shape: f32[1,128], index: 4, kind: input, shape index: {}]
  %s5 = inlined_call_operand.hbm [shape: bf16[128,256], index: 5, kind: input, shape index: {}]
  %s6 = inlined_call_operand.vmem [shape: f32[1,256], index: 6, kind: input, shape index: {}]
  %s7 = inlined_call_operand.hbm [shape: f32[64,128], index: 7, kind: input, shape index: {}]
  %s8 = inlined_call_operand.hbm [shape: f32[64,384], index: 8, kind: output, shape index: {0}]
  %s9 = inlined_call_operand.vmem [shape: f32[64,1], index: 9, kind: output, shape index: {1}]
  %10 = xla_tuple %s8, %s9
  %s11 = sld [smem:[#allocation0]]
  $region81: #{tpu_custom_call.1} parent=0
    _
  %s13 = ssub.s32 1, %s11
  %s14 = scalar_select 0, %s13, %s11
  $region1: #{tpu_custom_call.1} parent=0
    #allocation2 [shape = 'u8[65536]{0}', space=vmem, size = 0x10000, scoped, tag = 'input window, operand 5, single buffered']
    #allocation3 [shape = 's32[2]{0}', space=sflag, size = 0x8, scoped, tag = 'scoped memory for tpu_custom_call.1']
    #allocation4 [shape = 's32[2]{0}', space=sflag, size = 0x8, scoped, tag = 'scoped memory for tpu_custom_call.1']
    #allocation5 [shape = 'u8[32768]{0}', space=vmem, size = 0x8000, scoped, tag = 'input window, operand 7']
    #allocation6 [shape = 's32[2]{0}', space=sflag, size = 0x8, scoped, tag = 'scoped memory for tpu_custom_call.1']
    #allocation7 [shape = 'u8[98304]{0}', space=vmem, size = 0x18000, scoped, tag = 'output window, operand 0']
    %15 = vsyncpa [#allocation3], 0
    %16 = vsyncpa [#allocation6], 0
    %s17 = scalar_lea.sflag [#allocation6], 1
    %18 = vsyncpa %s17, 0
    %19 = vsyncpa [#allocation4], 0
    %s20 = scalar_lea.sflag [#allocation4], 1
    %21 = vsyncpa %s20, 0
    loop: start=0, step=1, limit=4
    $region2: #{tpu_custom_call.1} parent=1 // loop_pre_header
      _
    $region3: #{tpu_custom_call.1} parent=1 // loop_header
      %s23 = sphi 0, %s27
      %p24 = scmp.ge.s32.totalorder %s23, 4
      %s33 = sphi 0, %s35
      %s36 = sphi 0, %s33
      %s37 = sphi 0, %s36
      %s53 = sphi 0, %s37
      %s57 = sphi 0, %s57
      %s59 = sphi 0, %s57
      %s60 = sphi 0, %s59
      %s74 = sphi 0, %s60
      %s78 = sphi 0, %s78
      %s80 = sphi 0, %s78
      %s81 = sphi 0, %s80
      %s95 = sphi 0, %s81
      %s99 = sphi 0, %s99
      %s101 = sphi 0, %s99
      %s102 = sphi 0, %s101
      %s116 = sphi 0, %s102
      %s120 = sphi 0, %s120
      %s122 = sphi 0, %s120
      %s123 = sphi 0, %s122
      %s137 = sphi 0, %s123
      %s141 = sphi 0, %s141
      %s143 = sphi 0, %s141
      %s144 = sphi 0, %s143
      %s158 = sphi 0, %s144
      %s162 = sphi 0, %s162
      %s164 = sphi 0, %s162
      %s165 = sphi 0, %s164
      %s179 = sphi 0, %s165
      %s185 = sphi 0, %s187
      %s188 = sphi 0, %s185
      %s189 = sphi 0, %s188
      %s205 = sphi 0, %s189
      %s211 = sphi 0, %s213
      %s214 = sphi 0, %s211
      %s215 = sphi 0, %s214
      %s231 = sphi 0, %s215
      %s237 = sphi 0, %s239
      %s240 = sphi 0, %s237
      %s241 = sphi 0, %s240
      %s257 = sphi 0, %s241
    $region4: #{tpu_custom_call.1} parent=1 // loop_header_branch
      %26 = sbr.rel (%p24) target = $region8
    $region5: #{tpu_custom_call.1} parent=1 // loop_body
      %s28 = ssub.s32 %s23, 1
      %s29 = ssub.s32 %s23, 2
      %s30 = sadd.s32 %s23, 1
      %s31 = ssub.s32 %s23, %s30
      %p32 = scmp.eq.s32.totalorder %s31, 0
      %s34 = sadd.s32 %s33, 1
      %s35 = scalar_select %p32, %s33, %s34
      %p38 = pneg %p32
      %p39 = scmp.eq.s32.totalorder %s23, 1
      %p40 = por %p38, %p39
      %p41 = scmp.ne.s32.totalorder %s33, %s36
      %p42 = scmp.eq.s32.totalorder %s23, 0
      %p43 = por %p41, %p42
      %p44 = scmp.ne.s32.totalorder %s33, %s36
      %p45 = scmp.eq.s32.totalorder %s28, 1
      %p46 = por %p44, %p45
      %p47 = scmp.ne.s32.totalorder %s36, %s37
      %p48 = scmp.eq.s32.totalorder %s28, 0
      %p49 = por %p47, %p48
      %p50 = scmp.ne.s32.totalorder %s36, %s37
      %p51 = scmp.eq.s32.totalorder %s29, 1
      %p52 = por %p50, %p51
      %p54 = scmp.ne.s32.totalorder %s37, %s53
      %p55 = scmp.eq.s32.totalorder %s29, 0
      %p56 = por %p54, %p55
      %s58 = sadd.s32 %s57, 1
      %p61 = scmp.eq.s32.totalorder %s23, 1
      %p62 = scmp.ne.s32.totalorder %s57, %s59
      %p63 = scmp.eq.s32.totalorder %s23, 0
      %p64 = por %p62, %p63
      %p65 = scmp.ne.s32.totalorder %s57, %s59
      %p66 = scmp.eq.s32.totalorder %s28, 1
      %p67 = por %p65, %p66
      %p68 = scmp.ne.s32.totalorder %s59, %s60
      %p69 = scmp.eq.s32.totalorder %s28, 0
      %p70 = por %p68, %p69
      %p71 = scmp.ne.s32.totalorder %s59, %s60
      %p72 = scmp.eq.s32.totalorder %s29, 1
      %p73 = por %p71, %p72
      %p75 = scmp.ne.s32.totalorder %s60, %s74
      %p76 = scmp.eq.s32.totalorder %s29, 0
      %p77 = por %p75, %p76
      %s79 = sadd.s32 %s78, 1
      %p82 = scmp.eq.s32.totalorder %s23, 1
      %p83 = scmp.ne.s32.totalorder %s78, %s80
      %p84 = scmp.eq.s32.totalorder %s23, 0
      %p85 = por %p83, %p84
      %p86 = scmp.ne.s32.totalorder %s78, %s80
      %p87 = scmp.eq.s32.totalorder %s28, 1
      %p88 = por %p86, %p87
      %p89 = scmp.ne.s32.totalorder %s80, %s81
      %p90 = scmp.eq.s32.totalorder %s28, 0
      %p91 = por %p89, %p90
      %p92 = scmp.ne.s32.totalorder %s80, %s81
      %p93 = scmp.eq.s32.totalorder %s29, 1
      %p94 = por %p92, %p93
      %p96 = scmp.ne.s32.totalorder %s81, %s95
      %p97 = scmp.eq.s32.totalorder %s29, 0
      %p98 = por %p96, %p97
      %s100 = sadd.s32 %s99, 1
      %p103 = scmp.eq.s32.totalorder %s23, 1
      %p104 = scmp.ne.s32.totalorder %s99, %s101
      %p105 = scmp.eq.s32.totalorder %s23, 0
      %p106 = por %p104, %p105
      %p107 = scmp.ne.s32.totalorder %s99, %s101
      %p108 = scmp.eq.s32.totalorder %s28, 1
      %p109 = por %p107, %p108
      %p110 = scmp.ne.s32.totalorder %s101, %s102
      %p111 = scmp.eq.s32.totalorder %s28, 0
      %p112 = por %p110, %p111
      %p113 = scmp.ne.s32.totalorder %s101, %s102
      %p114 = scmp.eq.s32.totalorder %s29, 1
      %p115 = por %p113, %p114
      %p117 = scmp.ne.s32.totalorder %s102, %s116
      %p118 = scmp.eq.s32.totalorder %s29, 0
      %p119 = por %p117, %p118
      %s121 = sadd.s32 %s120, 1
      %p124 = scmp.eq.s32.totalorder %s23, 1
      %p125 = scmp.ne.s32.totalorder %s120, %s122
      %p126 = scmp.eq.s32.totalorder %s23, 0
      %p127 = por %p125, %p126
      %p128 = scmp.ne.s32.totalorder %s120, %s122
      %p129 = scmp.eq.s32.totalorder %s28, 1
      %p130 = por %p128, %p129
      %p131 = scmp.ne.s32.totalorder %s122, %s123
      %p132 = scmp.eq.s32.totalorder %s28, 0
      %p133 = por %p131, %p132
      %p134 = scmp.ne.s32.totalorder %s122, %s123
      %p135 = scmp.eq.s32.totalorder %s29, 1
      %p136 = por %p134, %p135
      %p138 = scmp.ne.s32.totalorder %s123, %s137
      %p139 = scmp.eq.s32.totalorder %s29, 0
      %p140 = por %p138, %p139
      %s142 = sadd.s32 %s141, 1
      %p145 = scmp.eq.s32.totalorder %s23, 1
      %p146 = scmp.ne.s32.totalorder %s141, %s143
      %p147 = scmp.eq.s32.totalorder %s23, 0
      %p148 = por %p146, %p147
      %p149 = scmp.ne.s32.totalorder %s141, %s143
      %p150 = scmp.eq.s32.totalorder %s28, 1
      %p151 = por %p149, %p150
      %p152 = scmp.ne.s32.totalorder %s143, %s144
      %p153 = scmp.eq.s32.totalorder %s28, 0
      %p154 = por %p152, %p153
      %p155 = scmp.ne.s32.totalorder %s143, %s144
      %p156 = scmp.eq.s32.totalorder %s29, 1
      %p157 = por %p155, %p156
      %p159 = scmp.ne.s32.totalorder %s144, %s158
      %p160 = scmp.eq.s32.totalorder %s29, 0
      %p161 = por %p159, %p160
      %s163 = sadd.s32 %s162, 1
      %p166 = scmp.eq.s32.totalorder %s23, 1
      %p167 = scmp.ne.s32.totalorder %s162, %s164
      %p168 = scmp.eq.s32.totalorder %s23, 0
      %p169 = por %p167, %p168
      %p170 = scmp.ne.s32.totalorder %s162, %s164
      %p171 = scmp.eq.s32.totalorder %s28, 1
      %p172 = por %p170, %p171
      %p173 = scmp.ne.s32.totalorder %s164, %s165
      %p174 = scmp.eq.s32.totalorder %s28, 0
      %p175 = por %p173, %p174
      %p176 = scmp.ne.s32.totalorder %s164, %s165
      %p177 = scmp.eq.s32.totalorder %s29, 1
      %p178 = por %p176, %p177
      %p180 = scmp.ne.s32.totalorder %s165, %s179
      %p181 = scmp.eq.s32.totalorder %s29, 0
      %p182 = por %p180, %p181
      %s183 = ssub.s32 %s23, %s30
      %p184 = scmp.eq.s32.totalorder %s183, 0
      %s186 = sadd.s32 %s185, 1
      %s187 = scalar_select %p184, %s185, %s186
      %p190 = pneg %p184
      %p191 = scmp.eq.s32.totalorder %s23, 1
      %p192 = por %p190, %p191
      %p193 = scmp.ne.s32.totalorder %s185, %s188
      %p194 = scmp.eq.s32.totalorder %s23, 0
      %p195 = por %p193, %p194
      %p196 = scmp.ne.s32.totalorder %s185, %s188
      %p197 = scmp.eq.s32.totalorder %s28, 1
      %p198 = por %p196, %p197
      %p199 = scmp.ne.s32.totalorder %s188, %s189
      %p200 = scmp.eq.s32.totalorder %s28, 0
      %p201 = por %p199, %p200
      %p202 = scmp.ne.s32.totalorder %s188, %s189
      %p203 = scmp.eq.s32.totalorder %s29, 1
      %p204 = por %p202, %p203
      %p206 = scmp.ne.s32.totalorder %s189, %s205
      %p207 = scmp.eq.s32.totalorder %s29, 0
      %p208 = por %p206, %p207
      %s209 = ssub.s32 %s23, %s30
      %p210 = scmp.eq.s32.totalorder %s209, 0
      %s212 = sadd.s32 %s211, 1
      %s213 = scalar_select %p210, %s211, %s212
      %p216 = pneg %p210
      %p217 = scmp.eq.s32.totalorder %s23, 1
      %p218 = por %p216, %p217
      %p219 = scmp.ne.s32.totalorder %s211, %s214
      %p220 = scmp.eq.s32.totalorder %s23, 0
      %p221 = por %p219, %p220
      %p222 = scmp.ne.s32.totalorder %s211, %s214
      %p223 = scmp.eq.s32.totalorder %s28, 1
      %p224 = por %p222, %p223
      %p225 = scmp.ne.s32.totalorder %s214, %s215
      %p226 = scmp.eq.s32.totalorder %s28, 0
      %p227 = por %p225, %p226
      %p228 = scmp.ne.s32.totalorder %s214, %s215
      %p229 = scmp.eq.s32.totalorder %s29, 1
      %p230 = por %p228, %p229
      %p232 = scmp.ne.s32.totalorder %s215, %s231
      %p233 = scmp.eq.s32.totalorder %s29, 0
      %p234 = por %p232, %p233
      %s235 = ssub.s32 %s23, %s30
      %p236 = scmp.eq.s32.totalorder %s235, 0
      %s238 = sadd.s32 %s237, 1
      %s239 = scalar_select %p236, %s237, %s238
      %p242 = pneg %p236
      %p243 = scmp.eq.s32.totalorder %s23, 1
      %p244 = por %p242, %p243
      %p245 = scmp.ne.s32.totalorder %s237, %s240
      %p246 = scmp.eq.s32.totalorder %s23, 0
      %p247 = por %p245, %p246
      %p248 = scmp.ne.s32.totalorder %s237, %s240
      %p249 = scmp.eq.s32.totalorder %s28, 1
      %p250 = por %p248, %p249
      %p251 = scmp.ne.s32.totalorder %s240, %s241
      %p252 = scmp.eq.s32.totalorder %s28, 0
      %p253 = por %p251, %p252
      %p254 = scmp.ne.s32.totalorder %s240, %s241
      %p255 = scmp.eq.s32.totalorder %s29, 1
      %p256 = por %p254, %p255
      %p258 = scmp.ne.s32.totalorder %s241, %s257
      %p259 = scmp.eq.s32.totalorder %s29, 0
      %p260 = por %p258, %p259
      %p261 = scmp.le.s32.totalorder 1, %s23
      %p262 = scmp.lt.s32.totalorder %s23, 3
      %p263 = pnand %p261, %p262
      %p264 = pneg %p263
      // Predicated region
      $region9: #{tpu_custom_call.1} parent=5 // pred_check
        _
      $region10: #{tpu_custom_call.1} parent=5 // pred_check_branch
        %266 = sbr.rel (%p263) target = $region12
      $region11: #{tpu_custom_call.1} parent=5 // pred_region
        %s267 = ssub.s32 %s23, 1
        // Predicated region
        $region13: #{tpu_custom_call.1} parent=11 // pred_check
          %p268 = pneg %p70
        $region14: #{tpu_custom_call.1} parent=11 // pred_check_branch
          %270 = sbr.rel (%p268) target = $region16
        $region15: #{tpu_custom_call.1} parent=11 // pred_region
          _
        $region16: #{tpu_custom_call.1} parent=11 // pred_fallthru
          _
        // Predicated region
        $region17: #{tpu_custom_call.1} parent=11 // pred_check
          %p271 = pneg %p91
        $region18: #{tpu_custom_call.1} parent=11 // pred_check_branch
          %273 = sbr.rel (%p271) target = $region20
        $region19: #{tpu_custom_call.1} parent=11 // pred_region
          _
        $region20: #{tpu_custom_call.1} parent=11 // pred_fallthru
          _
        // Predicated region
        $region21: #{tpu_custom_call.1} parent=11 // pred_check
          %p274 = pneg %p112
        $region22: #{tpu_custom_call.1} parent=11 // pred_check_branch
          %276 = sbr.rel (%p274) target = $region24
        $region23: #{tpu_custom_call.1} parent=11 // pred_region
          _
        $region24: #{tpu_custom_call.1} parent=11 // pred_fallthru
          _
        // Predicated region
        $region25: #{tpu_custom_call.1} parent=11 // pred_check
          %p277 = pneg %p133
        $region26: #{tpu_custom_call.1} parent=11 // pred_check_branch
          %279 = sbr.rel (%p277) target = $region28
        $region27: #{tpu_custom_call.1} parent=11 // pred_region
          _
        $region28: #{tpu_custom_call.1} parent=11 // pred_fallthru
          _
        // Predicated region
        $region29: #{tpu_custom_call.1} parent=11 // pred_check
          %p280 = pneg %p154
        $region30: #{tpu_custom_call.1} parent=11 // pred_check_branch
          %282 = sbr.rel (%p280) target = $region32
        $region31: #{tpu_custom_call.1} parent=11 // pred_region
          %s284 = ssub.s32 2048, 2048
          %285 = vsyncadd [#allocation3], %s284
          %s286 = sshll.u32 [#allocation2], 4
          %s287 = int_to_ptr.vmem [resolvable:$true] %s286
          %292 = dma.hbm_to_vmem [thread:$0]  %s5, 2048, %s287, [#allocation3], 128, 128, 8
        $region32: #{tpu_custom_call.1} parent=11 // pred_fallthru
          _
        // Predicated region
        $region33: #{tpu_custom_call.1} parent=11 // pred_check
          %p293 = pneg %p175
        $region34: #{tpu_custom_call.1} parent=11 // pred_check_branch
          %295 = sbr.rel (%p293) target = $region36
        $region35: #{tpu_custom_call.1} parent=11 // pred_region
          _
        $region36: #{tpu_custom_call.1} parent=11 // pred_fallthru
          _
      $region12: #{tpu_custom_call.1} parent=5 // pred_fallthru
        _
      %p296 = scmp.lt.s32.totalorder %s23, 2
      // Predicated region
      $region37: #{tpu_custom_call.1} parent=5 // pred_check
        %p297 = pneg %p296
      $region38: #{tpu_custom_call.1} parent=5 // pred_check_branch
        %299 = sbr.rel (%p297) target = $region40
      $region39: #{tpu_custom_call.1} parent=5 // pred_region
        // Predicated region
        $region41: #{tpu_custom_call.1} parent=39 // pred_check
          %p300 = pneg %p43
        $region42: #{tpu_custom_call.1} parent=39 // pred_check_branch
          %302 = sbr.rel (%p300) target = $region44
        $region43: #{tpu_custom_call.1} parent=39 // pred_region
          %s303 = smul.u32 4, %s23
          %p304 = scmp.lt.s32.totalorder %s303, 7
          %s305 = scalar_select %p304, %s303, 7
          %s306 = smul.addr %s305, 8
          %s307 = scalar_lea.vmem %s0, %s306
          %s308 = smul.u32 4, %s23
        $region44: #{tpu_custom_call.1} parent=39 // pred_fallthru
          _
        // Predicated region
        $region45: #{tpu_custom_call.1} parent=39 // pred_check
          %p309 = pneg %p195
        $region46: #{tpu_custom_call.1} parent=39 // pred_check_branch
          %311 = sbr.rel (%p309) target = $region48
        $region47: #{tpu_custom_call.1} parent=39 // pred_region
          %s312 = sand.u32 %s185, 1
          %s313 = scalar_lea.sflag [#allocation6], %s312
          %s314 = sand.u32 %s185, 1
          %s315 = smul.addr %s314, 32
          %s316 = scalar_lea.vmem [#allocation5], %s315
          %s317 = smul.u32 4, %s23
          %s319 = ssub.s32 512, 512
          %320 = vsyncadd %s313, %s319
          %s321 = smul.addr %s317, 128
          %s322 = scalar_lea.hbm %s7, %s321
          %s323 = sshll.u32 %s316, 4
          %s324 = int_to_ptr.vmem [resolvable:$true] %s323
          %329 = dma.hbm_to_vmem [thread:$0]  %s322, 512, %s324, %s313, 128, 128, 8
        $region48: #{tpu_custom_call.1} parent=39 // pred_fallthru
          _
      $region40: #{tpu_custom_call.1} parent=5 // pred_fallthru
        _
      %p330 = scmp.le.s32.totalorder 1, %s23
      %p331 = scmp.lt.s32.totalorder %s23, 3
      %p332 = pnand %p330, %p331
      %p333 = pneg %p332
      // Predicated region
      $region49: #{tpu_custom_call.1} parent=5 // pred_check
        _
      $region50: #{tpu_custom_call.1} parent=5 // pred_check_branch
        %335 = sbr.rel (%p332) target = $region52
      $region51: #{tpu_custom_call.1} parent=5 // pred_region
        %s336 = ssub.s32 %s23, 1
        // Predicated region
        $region53: #{tpu_custom_call.1} parent=51 // pred_check
          %p337 = pneg %p154
        $region54: #{tpu_custom_call.1} parent=51 // pred_check_branch
          %339 = sbr.rel (%p337) target = $region56
        $region55: #{tpu_custom_call.1} parent=51 // pred_region
          %340 = dma.done [#allocation3], 2048
        $region56: #{tpu_custom_call.1} parent=51 // pred_fallthru
          _
        %s341 = sand.u32 %s188, 1
        %s342 = scalar_lea.sflag [#allocation6], %s341
        %s343 = sand.u32 %s188, 1
        %s344 = smul.addr %s343, 32
        %s345 = scalar_lea.vmem [#allocation5], %s344
        // Predicated region
        $region57: #{tpu_custom_call.1} parent=51 // pred_check
          %p346 = pneg %p201
        $region58: #{tpu_custom_call.1} parent=51 // pred_check_branch
          %348 = sbr.rel (%p346) target = $region60
        $region59: #{tpu_custom_call.1} parent=51 // pred_region
          %349 = dma.done %s342, 512
        $region60: #{tpu_custom_call.1} parent=51 // pred_fallthru
          _
        %s350 = smul.u32 4, %s28
        %p351 = scmp.lt.s32.totalorder %s350, 7
        %s352 = scalar_select %p351, %s350, 7
        %s353 = smul.addr %s352, 8
        %s354 = scalar_lea.vmem %s0, %s353
        %p355 = pneg %p49
        %p356 = pneg %p46
        %p357 = pneg %p70
        %p358 = pneg %p67
        %p359 = pneg %p91
        %p360 = pneg %p88
        %p361 = pneg %p112
        %p362 = pneg %p109
        %p363 = pneg %p133
        %p364 = pneg %p130
        %p365 = pneg %p154
        %p366 = pneg %p151
        %p367 = pneg %p175
        %p368 = pneg %p172
        %s369 = sand.u32 %s188, 1
        %s370 = scalar_lea.sflag [#allocation6], %s369
        %s371 = sand.u32 %s188, 1
        %s372 = smul.addr %s371, 32
        %s373 = scalar_lea.vmem [#allocation5], %s372
        %p374 = pneg %p201
        %p375 = pneg %p198
        %p376 = pneg %p227
        %p377 = pneg %p224
        %s378 = sand.u32 %s214, 1
        %s379 = scalar_lea.sflag [#allocation4], %s378
        %s380 = sand.u32 %s214, 1
        %s381 = smul.addr %s380, 96
        %s382 = scalar_lea.vmem [#allocation7], %s381
        %p383 = pneg %p253
        %p384 = pneg %p250
        %s385 = smul.u32 4, %s28
        %p386 = scmp.lt.s32.totalorder %s385, 7
        %s387 = scalar_select %p386, %s385, 7
        %s388 = smul.addr %s387, 8
        %s389 = scalar_lea.vmem %s9, %s388
        %s390 = smul.u32 4, %s28
        %p391 = scmp.lt.s32.totalorder %s390, 7
        %s392 = scalar_select %p391, %s390, 7
        %s393 = smul.addr %s392, 8
        %s394 = scalar_lea.vmem %s0, %s393
        %s395 = smul.u32 4, %s28
        %s396 = smul.u32 4, %s28
        %s397 = smul.u32 4, %s28
        %s398 = smul.u32 4, %s28
        %p399 = scmp.lt.s32.totalorder %s398, 7
        %s400 = scalar_select %p399, %s398, 7
        %s401 = smul.addr %s400, 8
        %s402 = scalar_lea.vmem %s9, %s401
        %s403 = smul.u32 4, %s28
        %v405 = vld [vmem:[%s394] sm:$0xff]
        %v406 = vld [vmem:[%s394 + $0x8] sm:$0xff]
        %v407 = vld [vmem:[%s394 + $0x10] sm:$0xff]
        %v408 = vld [vmem:[%s394 + $0x18] sm:$0xff]
        %v409 = vpack.c.bf16 %v406, %v405
        %v410 = vpack.c.bf16 %v408, %v407
        %v411 = vld [vmem:[%s1] sm:$0xf]
        %v412 = vld [vmem:[%s1 + $0x4] sm:$0xf]
        %v413 = vld [vmem:[%s2] sm:$0x1]
        %v415 = vlaneseq
        %v416 = vshrl.u32 %v415, 7
        %v417 = vsub.s32 0, %v416
        %v418 = vrot.slane %v413, %v417
        %v422 = vunpack.c.l.b16 %v411
        %v423 = vunpack.c.l.b16 %v412
        %v424 = vpack.c.b16 %v423, %v422
        %vm426 = vcmask 130048
        %v428 = vsel %vm426, %v409, 0
        %v431 = vsel %vm426, %v410, 0
        %433 = vmatprep.subr.bf16.mxu0 0
        %434 = vmatpush1.bf16.msra.mxu0 %v424
        %435 = vmatprep.subr.bf16.mxu0 0
        %436 = vmatpush1.bf16.msra.mxu0 0
        %437 = vmatprep.subr.bf16.mxu0 0
        %438 = vmatpush1.bf16.msra.mxu0 0
        %439 = vmatprep.subr.bf16.mxu0 0
        %440 = vmatpush1.bf16.msra.mxu0 0
        %441 = vmatprep.subr.bf16.mxu0 0
        %442 = vmatpush1.bf16.msra.mxu0 0
        %443 = vmatprep.subr.bf16.mxu0 0
        %444 = vmatpush1.bf16.msra.mxu0 0
        %445 = vmatprep.subr.bf16.mxu0 0
        %446 = vmatpush1.bf16.msra.mxu0 0
        %447 = vmatprep.subr.bf16.mxu0 0
        %448 = vmatpush1.bf16.msra.mxu0 0
        %449 = vmatprep.subr.bf16.mxu0 0
        %450 = vmatpush1.bf16.msra.mxu0 0
        %451 = vmatprep.subr.bf16.mxu0 0
        %452 = vmatpush1.bf16.msra.mxu0 0
        %453 = vmatprep.subr.bf16.mxu0 0
        %454 = vmatpush1.bf16.msra.mxu0 0
        %455 = vmatprep.subr.bf16.mxu0 0
        %456 = vmatpush1.bf16.msra.mxu0 0
        %457 = vmatprep.subr.bf16.mxu0 0
        %458 = vmatpush1.bf16.msra.mxu0 0
        %459 = vmatprep.subr.bf16.mxu0 0
        %460 = vmatpush1.bf16.msra.mxu0 0
        %461 = vmatprep.subr.bf16.mxu0 0
        %462 = vmatpush1.bf16.msra.mxu0 0
        %463 = vmatprep.subr.bf16.mxu0 0
        %464 = vmatpush1.bf16.msra.mxu0 0
        %465 = vmatprep.mubr.bf16.mxu0 0
        %466 = vmatmul.mubr.bf16.gmra.mrb[0].mxu0 %v428
        %v467 = vpop.f32.mrb[0].mxu0
        %v468 = vadd.f32 %v418, %v467
        %v469 = vpop.f32.mrb[0].mxu0
        %v470 = vpop.f32.mrb[0].mxu0
        %v471 = vadd.f32 %v418, %v470
        %v472 = vpop.f32.mrb[0].mxu0
        %473 = vmatprep.mubr.bf16.mxu0 0
        %474 = vmatmul.mubr.bf16.gmra.mrb[0].mxu0 %v431
        %v475 = vpop.f32.mrb[0].mxu0
        %v476 = vadd.f32 %v418, %v475
        %v477 = vpop.f32.mrb[0].mxu0
        %v478 = vpop.f32.mrb[0].mxu0
        %v479 = vadd.f32 %v418, %v478
        %v480 = vpop.f32.mrb[0].mxu0
        %481 = vdwg.mxu0
        %vm482 = vcmp.gt.f32.partialorder %v468, 0.0
        %vm483 = vcmp.gt.f32.partialorder %v471, 0.0
        %vm484 = vcmp.gt.f32.partialorder %v476, 0.0
        %vm485 = vcmp.gt.f32.partialorder %v479, 0.0
        %v486 = vmul.f32 %v468, 0.01
        %v487 = vmul.f32 %v471, 0.01
        %v488 = vmul.f32 %v476, 0.01
        %v489 = vmul.f32 %v479, 0.01
        %v490 = vsel %vm482, %v468, %v486
        %v491 = vsel %vm483, %v471, %v487
        %v492 = vsel %vm484, %v476, %v488
        %v493 = vsel %vm485, %v479, %v489
        %v494 = vpack.c.bf16 %v491, %v490
        %v495 = vpack.c.bf16 %v493, %v492
        %v496 = vld [vmem:[%s3] sm:$0xf]
        %v497 = vld [vmem:[%s3 + $0x4] sm:$0xf]
        %v498 = vld [vmem:[%s3 + $0x8] sm:$0xf]
        %v499 = vld [vmem:[%s3 + $0xc] sm:$0xf]
        %v500 = vld [vmem:[%s3 + $0x10] sm:$0xf]
        %v501 = vld [vmem:[%s3 + $0x14] sm:$0xf]
        %v502 = vld [vmem:[%s3 + $0x18] sm:$0xf]
        %v503 = vld [vmem:[%s3 + $0x1c] sm:$0xf]
        %v504 = vld [vmem:[%s3 + $0x20] sm:$0xf]
        %v505 = vld [vmem:[%s3 + $0x24] sm:$0xf]
        %v506 = vld [vmem:[%s3 + $0x28] sm:$0xf]
        %v507 = vld [vmem:[%s3 + $0x2c] sm:$0xf]
        %v508 = vld [vmem:[%s3 + $0x30] sm:$0xf]
        %v509 = vld [vmem:[%s3 + $0x34] sm:$0xf]
        %v510 = vld [vmem:[%s3 + $0x38] sm:$0xf]
        %v511 = vld [vmem:[%s3 + $0x3c] sm:$0xf]
        %v512 = vld [vmem:[%s4] sm:$0x1]
        %v514 = vlaneseq
        %v515 = vshrl.u32 %v514, 7
        %v516 = vsub.s32 0, %v515
        %v517 = vrot.slane %v512, %v516
        %v535 = vunpack.c.l.b16 %v496
        %v536 = vunpack.c.l.b16 %v497
        %v537 = vunpack.c.l.b16 %v498
        %v538 = vunpack.c.l.b16 %v499
        %v539 = vunpack.c.l.b16 %v500
        %v540 = vunpack.c.l.b16 %v501
        %v541 = vunpack.c.l.b16 %v502
        %v542 = vunpack.c.l.b16 %v503
        %v543 = vunpack.c.l.b16 %v504
        %v544 = vunpack.c.l.b16 %v505
        %v545 = vunpack.c.l.b16 %v506
        %v546 = vunpack.c.l.b16 %v507
        %v547 = vunpack.c.l.b16 %v508
        %v548 = vunpack.c.l.b16 %v509
        %v549 = vunpack.c.l.b16 %v510
        %v550 = vunpack.c.l.b16 %v511
        %v551 = vpack.c.b16 %v536, %v535
        %v552 = vpack.c.b16 %v538, %v537
        %v553 = vpack.c.b16 %v540, %v539
        %v554 = vpack.c.b16 %v542, %v541
        %v555 = vpack.c.b16 %v544, %v543
        %v556 = vpack.c.b16 %v546, %v545
        %v557 = vpack.c.b16 %v548, %v547
        %v558 = vpack.c.b16 %v550, %v549
        %567 = vmatprep.subr.bf16.mxu0 0
        %568 = vmatpush1.bf16.msra.mxu0 %v551
        %569 = vmatprep.subr.bf16.mxu0 0
        %570 = vmatpush1.bf16.msra.mxu0 %v552
        %571 = vmatprep.subr.bf16.mxu0 0
        %572 = vmatpush1.bf16.msra.mxu0 %v553
        %573 = vmatprep.subr.bf16.mxu0 0
        %574 = vmatpush1.bf16.msra.mxu0 %v554
        %575 = vmatprep.subr.bf16.mxu0 0
        %576 = vmatpush1.bf16.msra.mxu0 %v555
        %577 = vmatprep.subr.bf16.mxu0 0
        %578 = vmatpush1.bf16.msra.mxu0 %v556
        %579 = vmatprep.subr.bf16.mxu0 0
        %580 = vmatpush1.bf16.msra.mxu0 %v557
        %581 = vmatprep.subr.bf16.mxu0 0
        %582 = vmatpush1.bf16.msra.mxu0 %v558
        %583 = vmatprep.subr.bf16.mxu0 0
        %584 = vmatpush1.bf16.msra.mxu0 0
        %585 = vmatprep.subr.bf16.mxu0 0
        %586 = vmatpush1.bf16.msra.mxu0 0
        %587 = vmatprep.subr.bf16.mxu0 0
        %588 = vmatpush1.bf16.msra.mxu0 0
        %589 = vmatprep.subr.bf16.mxu0 0
        %590 = vmatpush1.bf16.msra.mxu0 0
        %591 = vmatprep.subr.bf16.mxu0 0
        %592 = vmatpush1.bf16.msra.mxu0 0
        %593 = vmatprep.subr.bf16.mxu0 0
        %594 = vmatpush1.bf16.msra.mxu0 0
        %595 = vmatprep.subr.bf16.mxu0 0
        %596 = vmatpush1.bf16.msra.mxu0 0
        %597 = vmatprep.subr.bf16.mxu0 0
        %598 = vmatpush1.bf16.msra.mxu0 0
        %599 = vmatprep.mubr.bf16.mxu0 0
        %600 = vmatmul.mubr.bf16.gmra.mrb[0].mxu0 %v494
        %v601 = vpop.f32.mrb[0].mxu0
        %v602 = vadd.f32 %v517, %v601
        %v603 = vpop.f32.mrb[0].mxu0
        %v604 = vpop.f32.mrb[0].mxu0
        %v605 = vadd.f32 %v517, %v604
        %v606 = vpop.f32.mrb[0].mxu0
        %607 = vmatprep.mubr.bf16.mxu0 0
        %608 = vmatmul.mubr.bf16.gmra.mrb[0].mxu0 %v495
        %v609 = vpop.f32.mrb[0].mxu0
        %v610 = vadd.f32 %v517, %v609
        %v611 = vpop.f32.mrb[0].mxu0
        %v612 = vpop.f32.mrb[0].mxu0
        %v613 = vadd.f32 %v517, %v612
        %v614 = vpop.f32.mrb[0].mxu0
        %615 = vdwg.mxu0
        %vm616 = vcmp.gt.f32.partialorder %v602, 0.0
        %vm617 = vcmp.gt.f32.partialorder %v605, 0.0
        %vm618 = vcmp.gt.f32.partialorder %v610, 0.0
        %vm619 = vcmp.gt.f32.partialorder %v613, 0.0
        %v620 = vmul.f32 %v602, 0.01
        %v621 = vmul.f32 %v605, 0.01
        %v622 = vmul.f32 %v610, 0.01
        %v623 = vmul.f32 %v613, 0.01
        %v624 = vsel %vm616, %v602, %v620
        %v625 = vsel %vm617, %v605, %v621
        %v626 = vsel %vm618, %v610, %v622
        %v627 = vsel %vm619, %v613, %v623
        %v628 = vmul.f32 %v624, %v624
        %v629 = vmul.f32 %v625, %v625
        %v630 = vmul.f32 %v626, %v626
        %v631 = vmul.f32 %v627, %v627
        %632 = vadd.xlane.f32.xlu0 %v628
        %v633 = vpop.xlane.xlu0 %632
        %634 = vadd.xlane.f32.xlu0 %v629
        %v635 = vpop.xlane.xlu0 %634
        %636 = vadd.xlane.f32.xlu0 %v630
        %v637 = vpop.xlane.xlu0 %636
        %638 = vadd.xlane.f32.xlu0 %v631
        %v639 = vpop.xlane.xlu0 %638
        %v640 = vadd.f32 %v633, 1e-12
        %v641 = vadd.f32 %v635, 1e-12
        %v642 = vadd.f32 %v637, 1e-12
        %v643 = vadd.f32 %v639, 1e-12
        %v644 = vrsqrt.pop %v640
        %v645 = vrsqrt.pop %v641
        %v646 = vrsqrt.pop %v642
        %v647 = vrsqrt.pop %v643
        %v648 = vmul.f32 %v624, %v644
        %v649 = vmul.f32 %v625, %v645
        %v650 = vmul.f32 %v626, %v646
        %v651 = vmul.f32 %v627, %v647
        %v652 = vpack.c.bf16 %v649, %v648
        %v653 = vpack.c.bf16 %v651, %v650
        %v654 = vld [vmem:[#allocation2] sm:$0xff]
        %v655 = vld [vmem:[#allocation2 + $0x8] sm:$0xff]
        %v656 = vld [vmem:[#allocation2 + $0x10] sm:$0xff]
        %v657 = vld [vmem:[#allocation2 + $0x18] sm:$0xff]
        %v658 = vld [vmem:[#allocation2 + $0x20] sm:$0xff]
        %v659 = vld [vmem:[#allocation2 + $0x28] sm:$0xff]
        %v660 = vld [vmem:[#allocation2 + $0x30] sm:$0xff]
        %v661 = vld [vmem:[#allocation2 + $0x38] sm:$0xff]
        %v662 = vld [vmem:[#allocation2 + $0x40] sm:$0xff]
        %v663 = vld [vmem:[#allocation2 + $0x48] sm:$0xff]
        %v664 = vld [vmem:[#allocation2 + $0x50] sm:$0xff]
        %v665 = vld [vmem:[#allocation2 + $0x58] sm:$0xff]
        %v666 = vld [vmem:[#allocation2 + $0x60] sm:$0xff]
        %v667 = vld [vmem:[#allocation2 + $0x68] sm:$0xff]
        %v668 = vld [vmem:[#allocation2 + $0x70] sm:$0xff]
        %v669 = vld [vmem:[#allocation2 + $0x78] sm:$0xff]
        %v670 = vld [vmem:[%s6] sm:$0x3]
        %v672 = vlaneseq
        %v673 = vshrl.u32 %v672, 7
        %v674 = vsub.s32 0, %v673
        %v675 = vrot.slane %v670, %v674
        %v676 = vlaneseq
        %v677 = vshrl.u32 %v676, 7
        %v678 = vsub.s32 1, %v677
        %v679 = vrot.slane %v670, %v678
        %v698 = vunpack.c.l.b16 %v654
        %v699 = vunpack.c.h.b16 %v654
        %v700 = vunpack.c.l.b16 %v655
        %v701 = vunpack.c.h.b16 %v655
        %v702 = vunpack.c.l.b16 %v656
        %v703 = vunpack.c.h.b16 %v656
        %v704 = vunpack.c.l.b16 %v657
        %v705 = vunpack.c.h.b16 %v657
        %v706 = vunpack.c.l.b16 %v658
        %v707 = vunpack.c.h.b16 %v658
        %v708 = vunpack.c.l.b16 %v659
        %v709 = vunpack.c.h.b16 %v659
        %v710 = vunpack.c.l.b16 %v660
        %v711 = vunpack.c.h.b16 %v660
        %v712 = vunpack.c.l.b16 %v661
        %v713 = vunpack.c.h.b16 %v661
        %v714 = vunpack.c.l.b16 %v662
        %v715 = vunpack.c.h.b16 %v662
        %v716 = vunpack.c.l.b16 %v663
        %v717 = vunpack.c.h.b16 %v663
        %v718 = vunpack.c.l.b16 %v664
        %v719 = vunpack.c.h.b16 %v664
        %v720 = vunpack.c.l.b16 %v665
        %v721 = vunpack.c.h.b16 %v665
        %v722 = vunpack.c.l.b16 %v666
        %v723 = vunpack.c.h.b16 %v666
        %v724 = vunpack.c.l.b16 %v667
        %v725 = vunpack.c.h.b16 %v667
        %v726 = vunpack.c.l.b16 %v668
        %v727 = vunpack.c.h.b16 %v668
        %v728 = vunpack.c.l.b16 %v669
        %v729 = vunpack.c.h.b16 %v669
        %v730 = vpack.c.b16 %v700, %v698
        %v731 = vpack.c.b16 %v701, %v699
        %v732 = vpack.c.b16 %v704, %v702
        %v733 = vpack.c.b16 %v705, %v703
        %v734 = vpack.c.b16 %v708, %v706
        %v735 = vpack.c.b16 %v709, %v707
        %v736 = vpack.c.b16 %v712, %v710
        %v737 = vpack.c.b16 %v713, %v711
        %v738 = vpack.c.b16 %v716, %v714
        %v739 = vpack.c.b16 %v717, %v715
        %v740 = vpack.c.b16 %v720, %v718
        %v741 = vpack.c.b16 %v721, %v719
        %v742 = vpack.c.b16 %v724, %v722
        %v743 = vpack.c.b16 %v725, %v723
        %v744 = vpack.c.b16 %v728, %v726
        %v745 = vpack.c.b16 %v729, %v727
        %762 = vmatprep.subr.bf16.mxu0 %v731
        %763 = vmatpush1.bf16.msra.mxu0 %v730
        %764 = vmatprep.subr.bf16.mxu0 %v733
        %765 = vmatpush1.bf16.msra.mxu0 %v732
        %766 = vmatprep.subr.bf16.mxu0 %v735
        %767 = vmatpush1.bf16.msra.mxu0 %v734
        %768 = vmatprep.subr.bf16.mxu0 %v737
        %769 = vmatpush1.bf16.msra.mxu0 %v736
        %770 = vmatprep.subr.bf16.mxu0 %v739
        %771 = vmatpush1.bf16.msra.mxu0 %v738
        %772 = vmatprep.subr.bf16.mxu0 %v741
        %773 = vmatpush1.bf16.msra.mxu0 %v740
        %774 = vmatprep.subr.bf16.mxu0 %v743
        %775 = vmatpush1.bf16.msra.mxu0 %v742
        %776 = vmatprep.subr.bf16.mxu0 %v745
        %777 = vmatpush1.bf16.msra.mxu0 %v744
        %778 = vmatprep.subr.bf16.mxu0 0
        %779 = vmatpush1.bf16.msra.mxu0 0
        %780 = vmatprep.subr.bf16.mxu0 0
        %781 = vmatpush1.bf16.msra.mxu0 0
        %782 = vmatprep.subr.bf16.mxu0 0
        %783 = vmatpush1.bf16.msra.mxu0 0
        %784 = vmatprep.subr.bf16.mxu0 0
        %785 = vmatpush1.bf16.msra.mxu0 0
        %786 = vmatprep.subr.bf16.mxu0 0
        %787 = vmatpush1.bf16.msra.mxu0 0
        %788 = vmatprep.subr.bf16.mxu0 0
        %789 = vmatpush1.bf16.msra.mxu0 0
        %790 = vmatprep.subr.bf16.mxu0 0
        %791 = vmatpush1.bf16.msra.mxu0 0
        %792 = vmatprep.subr.bf16.mxu0 0
        %793 = vmatpush1.bf16.msra.mxu0 0
        %794 = vmatprep.mubr.bf16.mxu0 0
        %795 = vmatmul.mubr.bf16.gmra.mrb[0].mxu0 %v652
        %v796 = vpop.f32.mrb[0].mxu0
        %v797 = vadd.f32 %v675, %v796
        %v798 = vpop.f32.mrb[0].mxu0
        %v799 = vadd.f32 %v679, %v798
        %v800 = vpop.f32.mrb[0].mxu0
        %v801 = vadd.f32 %v675, %v800
        %v802 = vpop.f32.mrb[0].mxu0
        %v803 = vadd.f32 %v679, %v802
        %804 = vmatprep.mubr.bf16.mxu0 0
        %805 = vmatmul.mubr.bf16.gmra.mrb[0].mxu0 %v653
        %v806 = vpop.f32.mrb[0].mxu0
        %v807 = vadd.f32 %v675, %v806
        %v808 = vpop.f32.mrb[0].mxu0
        %v809 = vadd.f32 %v679, %v808
        %v810 = vpop.f32.mrb[0].mxu0
        %v811 = vadd.f32 %v675, %v810
        %v812 = vpop.f32.mrb[0].mxu0
        %v813 = vadd.f32 %v679, %v812
        %814 = vdwg.mxu0
        %v815 = vmax.f32 %v799, -20.0
        %v816 = vmax.f32 %v803, -20.0
        %v817 = vmax.f32 %v809, -20.0
        %v818 = vmax.f32 %v813, -20.0
        %v819 = vmin.f32 %v815, 2.0
        %v820 = vmin.f32 %v816, 2.0
        %v821 = vmin.f32 %v817, 2.0
        %v822 = vmin.f32 %v818, 2.0
        %v823 = vmul.f32 %v819, 0.5
        %v824 = vmul.f32 %v820, 0.5
        %v825 = vmul.f32 %v821, 0.5
        %v826 = vmul.f32 %v822, 0.5
        %v827 = vmul.f32 %v823, 1.442695
        %v828 = vpow.pop %v827
        %v829 = vmul.f32 %v824, 1.442695
        %v830 = vpow.pop %v829
        %v831 = vmul.f32 %v825, 1.442695
        %v832 = vpow.pop %v831
        %v833 = vmul.f32 %v826, 1.442695
        %v834 = vpow.pop %v833
        %v835 = vld [vmem:[%s345] sm:$0xff]
        %v836 = vld [vmem:[%s345 + $0x8] sm:$0xff]
        %v837 = vld [vmem:[%s345 + $0x10] sm:$0xff]
        %v838 = vld [vmem:[%s345 + $0x18] sm:$0xff]
        %v839 = vmul.f32 %v828, %v835
        %v840 = vmul.f32 %v830, %v836
        %v841 = vmul.f32 %v832, %v837
        %v842 = vmul.f32 %v834, %v838
        %v843 = vadd.f32 %v797, %v839
        %v844 = vadd.f32 %v801, %v840
        %v845 = vadd.f32 %v807, %v841
        %v846 = vadd.f32 %v811, %v842
        %v847 = vmul.f32 %v835, %v835
        %v848 = vmul.f32 %v836, %v836
        %v849 = vmul.f32 %v837, %v837
        %v850 = vmul.f32 %v838, %v838
        %851 = vadd.xlane.f32.xlu0 %v847
        %v852 = vpop.xlane.xlu0 %851
        %853 = vadd.xlane.f32.xlu0 %v848
        %v854 = vpop.xlane.xlu0 %853
        %855 = vadd.xlane.f32.xlu0 %v849
        %v856 = vpop.xlane.xlu0 %855
        %857 = vadd.xlane.f32.xlu0 %v850
        %v858 = vpop.xlane.xlu0 %857
        %v859 = vmul.f32 %v852, -0.5
        %v860 = vmul.f32 %v854, -0.5
        %v861 = vmul.f32 %v856, -0.5
        %v862 = vmul.f32 %v858, -0.5
        %863 = vadd.xlane.f32.xlu0 %v819
        %v864 = vpop.xlane.xlu0 %863
        %865 = vadd.xlane.f32.xlu0 %v820
        %v866 = vpop.xlane.xlu0 %865
        %867 = vadd.xlane.f32.xlu0 %v821
        %v868 = vpop.xlane.xlu0 %867
        %869 = vadd.xlane.f32.xlu0 %v822
        %v870 = vpop.xlane.xlu0 %869
        %v871 = vmul.f32 %v864, 0.5
        %v872 = vmul.f32 %v866, 0.5
        %v873 = vmul.f32 %v868, 0.5
        %v874 = vmul.f32 %v870, 0.5
        %v875 = vsub.f32 %v859, %v871
        %v876 = vsub.f32 %v860, %v872
        %v877 = vsub.f32 %v861, %v873
        %v878 = vsub.f32 %v862, %v874
        %v879 = vadd.f32 %v875, -3.675754
        %v880 = vadd.f32 %v876, -3.675754
        %v881 = vadd.f32 %v877, -3.675754
        %v882 = vadd.f32 %v878, -3.675754
        %v883 = vlaneseq
        %v884 = vand.u32 %v883, 127
        %vm885 = vcmp.lt.s32.totalorder %v884, 4
        %v886 = vsel %vm885, 1, 0
        %v887 = vcvt.s32.f32 %v886
        %v888 = vsub.f32 0.6931472, %v843
        %v889 = vsub.f32 0.6931472, %v844
        %v890 = vsub.f32 0.6931472, %v845
        %v891 = vsub.f32 0.6931472, %v846
        %v892 = vmul.f32 %v843, -2.0
        %v893 = vmul.f32 %v844, -2.0
        %v894 = vmul.f32 %v845, -2.0
        %v895 = vmul.f32 %v846, -2.0
        %v896 = vmax.f32 %v892, 0.0
        %v897 = vmax.f32 %v893, 0.0
        %v898 = vmax.f32 %v894, 0.0
        %v899 = vmax.f32 %v895, 0.0
        %v900 = vand.u32 2147483647, %v892
        %v901 = vand.u32 2147483647, %v893
        %v902 = vand.u32 2147483647, %v894
        %v903 = vand.u32 2147483647, %v895
        %v904 = vsub.f32 0.0, %v900
        %v905 = vsub.f32 0.0, %v901
        %v906 = vsub.f32 0.0, %v902
        %v907 = vsub.f32 0.0, %v903
        %v908 = vmul.f32 %v904, 1.442695
        %v909 = vpow.pop %v908
        %v910 = vmul.f32 %v905, 1.442695
        %v911 = vpow.pop %v910
        %v912 = vmul.f32 %v906, 1.442695
        %v913 = vpow.pop %v912
        %v914 = vmul.f32 %v907, 1.442695
        %v915 = vpow.pop %v914
        %v916 = vadd.f32 %v909, 1.0
        %v917 = vlog2.pop %v916
        %v918 = vmul.f32 %v917, 0.6931472
        %v919 = vmul.f32 -0.5, %v909
        %v920 = vadd.f32 %v919, 1.0
        %v921 = vmul.f32 %v920, %v909
        %v922 = vand.u32 2147483647, %v909
        %vm923 = vcmp.lt.f32.partialorder %v922, 0.0004427343
        %v924 = vsel %vm923, %v921, %v918
        %v925 = vadd.f32 %v911, 1.0
        %v926 = vlog2.pop %v925
        %v927 = vmul.f32 %v926, 0.6931472
        %v928 = vmul.f32 -0.5, %v911
        %v929 = vadd.f32 %v928, 1.0
        %v930 = vmul.f32 %v929, %v911
        %v931 = vand.u32 2147483647, %v911
        %vm932 = vcmp.lt.f32.partialorder %v931, 0.0004427343
        %v933 = vsel %vm932, %v930, %v927
        %v934 = vadd.f32 %v913, 1.0
        %v935 = vlog2.pop %v934
        %v936 = vmul.f32 %v935, 0.6931472
        %v937 = vmul.f32 -0.5, %v913
        %v938 = vadd.f32 %v937, 1.0
        %v939 = vmul.f32 %v938, %v913
        %v940 = vand.u32 2147483647, %v913
        %vm941 = vcmp.lt.f32.partialorder %v940, 0.0004427343
        %v942 = vsel %vm941, %v939, %v936
        %v943 = vadd.f32 %v915, 1.0
        %v944 = vlog2.pop %v943
        %v945 = vmul.f32 %v944, 0.6931472
        %v946 = vmul.f32 -0.5, %v915
        %v947 = vadd.f32 %v946, 1.0
        %v948 = vmul.f32 %v947, %v915
        %v949 = vand.u32 2147483647, %v915
        %vm950 = vcmp.lt.f32.partialorder %v949, 0.0004427343
        %v951 = vsel %vm950, %v948, %v945
        %v952 = vadd.f32 %v896, %v924
        %v953 = vadd.f32 %v897, %v933
        %v954 = vadd.f32 %v898, %v942
        %v955 = vadd.f32 %v899, %v951
        %v956 = vsub.f32 %v888, %v952
        %v957 = vsub.f32 %v889, %v953
        %v958 = vsub.f32 %v890, %v954
        %v959 = vsub.f32 %v891, %v955
        %v960 = vmul.f32 %v956, 2.0
        %v961 = vmul.f32 %v957, 2.0
        %v962 = vmul.f32 %v958, 2.0
        %v963 = vmul.f32 %v959, 2.0
        %v964 = vmul.f32 %v960, %v887
        %v965 = vmul.f32 %v961, %v887
        %v966 = vmul.f32 %v962, %v887
        %v967 = vmul.f32 %v963, %v887
        %968 = vadd.xlane.f32.xlu0 %v964
        %v969 = vpop.xlane.xlu0 %968
        %970 = vadd.xlane.f32.xlu0 %v965
        %v971 = vpop.xlane.xlu0 %970
        %972 = vadd.xlane.f32.xlu0 %v966
        %v973 = vpop.xlane.xlu0 %972
        %974 = vadd.xlane.f32.xlu0 %v967
        %v975 = vpop.xlane.xlu0 %974
        %v976 = vsub.f32 %v879, %v969
        %v977 = vsub.f32 %v880, %v971
        %v978 = vsub.f32 %v881, %v973
        %v979 = vsub.f32 %v882, %v975
        %980 = vst [vmem:[%s382] sm:$0xff] %v797
        %981 = vst [vmem:[%s382 + $0x18] sm:$0xff] %v801
        %982 = vst [vmem:[%s382 + $0x30] sm:$0xff] %v807
        %983 = vst [vmem:[%s382 + $0x48] sm:$0xff] %v811
        %984 = vst [vmem:[%s382 + $0x8] sm:$0xff] %v819
        %985 = vst [vmem:[%s382 + $0x20] sm:$0xff] %v820
        %986 = vst [vmem:[%s382 + $0x38] sm:$0xff] %v821
        %987 = vst [vmem:[%s382 + $0x50] sm:$0xff] %v822
        %988 = vst [vmem:[%s382 + $0x10] sm:$0xff] %v843
        %989 = vst [vmem:[%s382 + $0x28] sm:$0xff] %v844
        %990 = vst [vmem:[%s382 + $0x40] sm:$0xff] %v845
        %991 = vst [vmem:[%s382 + $0x58] sm:$0xff] %v846
        %vm992 = vcmask 7168
        %993 = vst.msk [vmem:[%s402] sm:$0xff] %vm992, %v976
        %994 = vst.msk [vmem:[%s402 + $0x8] sm:$0xff] %vm992, %v977
        %995 = vst.msk [vmem:[%s402 + $0x10] sm:$0xff] %vm992, %v978
        %996 = vst.msk [vmem:[%s402 + $0x18] sm:$0xff] %vm992, %v979
        %s997 = sand.u32 %s214, 1
        %s998 = scalar_lea.sflag [#allocation4], %s997
        %s999 = sand.u32 %s214, 1
        %s1000 = smul.addr %s999, 96
        %s1001 = scalar_lea.vmem [#allocation7], %s1000
        %s1002 = smul.u32 4, %s28
        %p1003 = scmp.lt.s32.totalorder %s1002, 7
        %s1004 = scalar_select %p1003, %s1002, 7
        %s1005 = smul.addr %s1004, 8
        %s1006 = scalar_lea.vmem %s9, %s1005
        // Predicated region
        $region61: #{tpu_custom_call.1} parent=51 // pred_check
          %p1007 = pneg %p224
        $region62: #{tpu_custom_call.1} parent=51 // pred_check_branch
          %1009 = sbr.rel (%p1007) target = $region64
        $region63: #{tpu_custom_call.1} parent=51 // pred_region
          %s1010 = smul.u32 4, %s28
          %s1012 = ssub.s32 1536, 1536
          %1013 = vsyncadd %s998, %s1012
          %s1014 = smul.addr %s1010, 3
          %s1015 = smul.addr %s1014, 128
          %s1016 = scalar_lea.hbm %s8, %s1015
          %s1017 = sshll.u32 %s1001, 4
          %s1018 = int_to_ptr.vmem [resolvable:$true] %s1017
          %1023 = dma.vmem_to_hbm [thread:$0]  %s1018, 1536, %s1016, %s998, 384, 384, 24
        $region64: #{tpu_custom_call.1} parent=51 // pred_fallthru
          _
        // Predicated region
        $region65: #{tpu_custom_call.1} parent=51 // pred_check
          %p1024 = pneg %p250
        $region66: #{tpu_custom_call.1} parent=51 // pred_check_branch
          %1026 = sbr.rel (%p1024) target = $region68
        $region67: #{tpu_custom_call.1} parent=51 // pred_region
          %s1027 = smul.u32 4, %s28
        $region68: #{tpu_custom_call.1} parent=51 // pred_fallthru
          _
      $region52: #{tpu_custom_call.1} parent=5 // pred_fallthru
        _
      %p1028 = scmp.le.s32.totalorder 2, %s23
      // Predicated region
      $region69: #{tpu_custom_call.1} parent=5 // pred_check
        %p1029 = pneg %p1028
      $region70: #{tpu_custom_call.1} parent=5 // pred_check_branch
        %1031 = sbr.rel (%p1029) target = $region72
      $region71: #{tpu_custom_call.1} parent=5 // pred_region
        %s1032 = ssub.s32 %s23, 2
        // Predicated region
        $region73: #{tpu_custom_call.1} parent=71 // pred_check
          %p1033 = pneg %p230
        $region74: #{tpu_custom_call.1} parent=71 // pred_check_branch
          %1035 = sbr.rel (%p1033) target = $region76
        $region75: #{tpu_custom_call.1} parent=71 // pred_region
          %s1036 = sand.u32 %s215, 1
          %s1037 = scalar_lea.sflag [#allocation4], %s1036
          %s1038 = sand.u32 %s215, 1
          %s1039 = smul.addr %s1038, 96
          %s1040 = scalar_lea.vmem [#allocation7], %s1039
          %1041 = dma.done %s1037, 1536
        $region76: #{tpu_custom_call.1} parent=71 // pred_fallthru
          _
        // Predicated region
        $region77: #{tpu_custom_call.1} parent=71 // pred_check
          %p1042 = pneg %p256
        $region78: #{tpu_custom_call.1} parent=71 // pred_check_branch
          %1044 = sbr.rel (%p1042) target = $region80
        $region79: #{tpu_custom_call.1} parent=71 // pred_region
          %s1045 = smul.u32 4, %s29
          %p1046 = scmp.lt.s32.totalorder %s1045, 7
          %s1047 = scalar_select %p1046, %s1045, 7
          %s1048 = smul.addr %s1047, 8
          %s1049 = scalar_lea.vmem %s9, %s1048
        $region80: #{tpu_custom_call.1} parent=71 // pred_fallthru
          _
      $region72: #{tpu_custom_call.1} parent=5 // pred_fallthru
        _
    $region6: #{tpu_custom_call.1} parent=1 // loop_footer
      %s27 = sadd.s32 1, %s23
    $region7: #{tpu_custom_call.1} parent=1 // loop_footer_branch
      %22 = sbr.rel target = $region3
    $region8: #{tpu_custom_call.1} parent=1 // loop_exit
      _
    %1050 = vsyncpa [#allocation3], 1
    %s1051 = scalar_lea.sflag [#allocation3], 1
    %1052 = vsyncpa %s1051, 1
    %1053 = vsyncpa [#allocation6], 1
    %s1054 = scalar_lea.sflag [#allocation6], 1
    %1055 = vsyncpa %s1054, 1
    %1056 = vsyncpa [#allocation4], 1
    %s1057 = scalar_lea.sflag [#allocation4], 1
    %1058 = vsyncpa %s1057, 1

</llo_original>
